<compile_context>
chip_gen: v7x
topology: tpu7x:2x2x1
jax: 0.10.0
libtpu: 0.0.40
codegen_flags: <defaults>
</compile_context>

<pallas_src>
import math
from functools import partial

import numpy as np

import jax
import jax.numpy as jnp
from jax import lax
from jax.experimental import pallas as pl
from jax.experimental.pallas import tpu as pltpu


# Conservative scoped-VMEM budget: safe on v5e/v6e (128 MiB physical) and v7x (64 MiB).
_VMEM_LIMIT_BYTES = 32 * 1024 * 1024
_NEG_INF = -1e30


def _round_up(x, m):
    return ((x + m - 1) // m) * m


def _pad_axis_to(x, axis, size):
    """Zero-pad `x` along `axis` up to `size` (no-op if already that size)."""
    pad = size - x.shape[axis]
    if pad == 0:
        return x
    widths = [(0, 0)] * x.ndim
    widths[axis] = (0, pad)
    return jnp.pad(x, widths)


def _tile_and_padded(dim, target):
    """Tile = full dim if it fits, else the aligned target; padded size = tile multiple."""
    if dim <= target:
        return dim, dim
    return target, _round_up(dim, target)


# --------------------------------------------------------------------------
# Tiled linear projection:  (M, K) @ (K, N) -> (M, N)
# --------------------------------------------------------------------------

def _matmul_kernel(x_ref, w_ref, o_ref, acc_ref):
    @pl.when(pl.program_id(2) == 0)
    def _():
        acc_ref[...] = jnp.zeros_like(acc_ref)

    # Native-dtype operands (bf16-ready), f32 accumulation on the MXU.
    acc_ref[...] += jnp.dot(x_ref[...], w_ref[...],
                            preferred_element_type=jnp.float32)

    @pl.when(pl.program_id(2) == pl.num_programs(2) - 1)
    def _():
        o_ref[...] = acc_ref[...].astype(o_ref.dtype)


def _linear(x2d, w_t, *, tm_target=512, tn_target=512, tk_target=1024):
    """x2d: (M, K); w_t: (K, N) pre-transposed weight.  Returns (M, N)."""
    M, K = x2d.shape
    Kw, N = w_t.shape
    assert K == Kw
    # Aligned tiles only: full dim when it fits, otherwise pad to a tile multiple.
    tm, Mp = _tile_and_padded(M, tm_target)
    tn, Np = _tile_and_padded(N, tn_target)
    tk, Kp = _tile_and_padded(K, tk_target)
    xp = _pad_axis_to(_pad_axis_to(x2d, 0, Mp), 1, Kp)
    wp = _pad_axis_to(_pad_axis_to(w_t, 0, Kp), 1, Np)
    grid = (Mp // tm, Np // tn, Kp // tk)

    out = pl.pallas_call(
        _matmul_kernel,
        out_shape=jax.ShapeDtypeStruct((Mp, Np), x2d.dtype),
        grid_spec=pltpu.PrefetchScalarGridSpec(
            num_scalar_prefetch=0,
            grid=grid,
            in_specs=[
                pl.BlockSpec((tm, tk), lambda i, j, k: (i, k)),
                pl.BlockSpec((tk, tn), lambda i, j, k: (k, j)),
            ],
            out_specs=pl.BlockSpec((tm, tn), lambda i, j, k: (i, j)),
            scratch_shapes=[pltpu.VMEM((tm, tn), jnp.float32)],
        ),
        compiler_params=pltpu.CompilerParams(
            dimension_semantics=("parallel", "parallel", "arbitrary"),
            vmem_limit_bytes=_VMEM_LIMIT_BYTES),
    )(xp, wp)
    if (Mp, Np) != (M, N):
        out = out[:M, :N]
    return out


# --------------------------------------------------------------------------
# Flash-style causal attention with GQA group batching
# --------------------------------------------------------------------------

def _flash_attn_kernel(q_ref, k_ref, v_ref, o_ref, m_ref, l_ref, acc_ref,
                       *, groups, tq, tk, offset):
    qi = pl.program_id(2)
    ki = pl.program_id(3)

    @pl.when(ki == 0)
    def _():
        m_ref[...] = jnp.full_like(m_ref, -jnp.inf)
        l_ref[...] = jnp.zeros_like(l_ref)
        acc_ref[...] = jnp.zeros_like(acc_ref)

    first_col = ki * tk
    last_col = first_col + (tk - 1)
    first_row_limit = qi * tq + offset               # col limit of this block's first query row
    last_row_limit = qi * tq + (tq - 1) + offset     # col limit of this block's last query row

    def flash_update(apply_mask):
        q = q_ref[0, 0]          # (groups*tq, D) — softmax scale already folded into w_q
        k = k_ref[0, 0]          # (tk, D)
        v = v_ref[0, 0]          # (tk, D)

        # QK^T: contract head_dim directly (no explicit transpose), f32 accumulation.
        s = lax.dot_general(q, k, (((1,), (1,)), ((), ())),
                            preferred_element_type=jnp.float32)   # (groups*tq, tk)

        if apply_mask:
            # Flattened row f covers query position f // groups (group-inner order).
            # Broadcast a (G*tq,1) limit column against a (1,tk) column-index row —
            # no full-tile iota / int-div temporaries.
            row_ids = lax.broadcasted_iota(jnp.int32, (groups * tq, 1), 0)
            if groups > 1:
                row_ids = row_ids // groups
            row_limit = first_row_limit + row_ids
            cols = first_col + lax.broadcasted_iota(jnp.int32, (1, tk), 1)
            s = jnp.where(cols <= row_limit, s, jnp.float32(_NEG_INF))

        m_prev = m_ref[...]
        m_new = jnp.maximum(m_prev, jnp.max(s, axis=-1, keepdims=True))
        alpha = jnp.exp(m_prev - m_new)
        p = jnp.exp(s - m_new)
        l_ref[...] = alpha * l_ref[...] + jnp.sum(p, axis=-1, keepdims=True)
        acc_ref[...] = alpha * acc_ref[...] + jnp.dot(
            p.astype(v.dtype), v, preferred_element_type=jnp.float32)
        m_ref[...] = m_new

    # Fully-unmasked interior tile: no mask math at all.
    @pl.when(last_col <= first_row_limit)
    def _():
        flash_update(False)

    # Partially-masked boundary tile: apply the causal mask.
    @pl.when(jnp.logical_and(first_col <= last_row_limit, last_col > first_row_limit))
    def _():
        flash_update(True)

    @pl.when(ki == pl.num_programs(3) - 1)
    def _():
        # EUP reciprocal instead of a VPU divide; one Newton step keeps f32 accuracy
        # at negligible cost on a (groups*tq, 1) column.
        l = l_ref[...]
        inv_l = pl.reciprocal(l, approx=True)
        inv_l = inv_l * (2.0 - l * inv_l)
        o_ref[0, 0] = (acc_ref[...] * inv_l).astype(o_ref.dtype)


def _flash_sdpa_gqa(q, k, v, *, groups):
    """q: (B, NKV, Sq*groups, D) group-interleaved (row = s*groups + g);
    k, v: (B, NKV, Sk, D).  Returns (B, NKV, Sq*groups, D)."""
    B, NKV, SqG, D = q.shape
    Sq = SqG // groups
    Sk = k.shape[2]
    offset = Sk - Sq     # real causal offset (right-aligned queries when a KV cache exists)

    tq_target = max(8, (256 // max(groups, 1)) // 8 * 8)   # groups*tq ~ 256 rows of QK^T
    tq, Sq_p = _tile_and_padded(Sq, tq_target)
    tk, Sk_p = _tile_and_padded(Sk, 256)
    if Sq_p != Sq:
        q = _pad_axis_to(q, 2, Sq_p * groups)
    if Sk_p != Sk:
        k = _pad_axis_to(k, 2, Sk_p)
        v = _pad_axis_to(v, 2, Sk_p)

    grid = (B, NKV, Sq_p // tq, Sk_p // tk)

    def kv_index_map(b, h, i, j):
        # Clamp to the last kv block this query block can attend to: masked
        # upper-triangle steps repeat the previous block index, so Pallas skips
        # the K/V DMA (not just the compute).
        last_needed = (i * tq + (tq - 1) + offset) // tk
        return (b, h, jnp.minimum(j, last_needed), 0)

    kernel = partial(_flash_attn_kernel, groups=groups, tq=tq, tk=tk, offset=offset)
    # TODO(synk): for head_dim < 128 loads/stores and the PV matmul are lane-sparse;
    # packing 128//D heads into the lane dim (or padding D) would make them dense at
    # the cost of in-kernel relayouts — not implemented here.
    out = pl.pallas_call(
        kernel,
        out_shape=jax.ShapeDtypeStruct((B, NKV, Sq_p * groups, D), q.dtype),
        grid_spec=pltpu.PrefetchScalarGridSpec(
            num_scalar_prefetch=0,
            grid=grid,
            in_specs=[
                pl.BlockSpec((1, 1, groups * tq, D), lambda b, h, i, j: (b, h, i, 0)),
                pl.BlockSpec((1, 1, tk, D), kv_index_map),
                pl.BlockSpec((1, 1, tk, D), kv_index_map),
            ],
            out_specs=pl.BlockSpec((1, 1, groups * tq, D),
                                   lambda b, h, i, j: (b, h, i, 0)),
            scratch_shapes=[
                pltpu.VMEM((groups * tq, 1), jnp.float32),   # running max
                pltpu.VMEM((groups * tq, 1), jnp.float32),   # running sum
                pltpu.VMEM((groups * tq, D), jnp.float32),   # output accumulator
            ],
        ),
        compiler_params=pltpu.CompilerParams(
            dimension_semantics=("parallel", "parallel", "parallel", "arbitrary"),
            vmem_limit_bytes=_VMEM_LIMIT_BYTES),
    )(q, k, v)
    if Sq_p != Sq:
        out = out[:, :, :Sq * groups]
    return out


# --------------------------------------------------------------------------
# Module-equivalent wrapper
# --------------------------------------------------------------------------

class StandardAttentionPallas:
    def __init__(self, hidden_size, num_attention_heads, num_key_value_heads=None,
                 key=None, dtype=jnp.float32, compute_dtype=None,
                 repeat_present_kv=True):
        if key is None:
            key = jax.random.PRNGKey(0)
        if num_key_value_heads is None:
            num_key_value_heads = num_attention_heads
        assert hidden_size % num_attention_heads == 0
        assert hidden_size % num_key_value_heads == 0
        self.hidden_size = hidden_size
        self.num_attention_heads = num_attention_heads
        self.num_key_value_heads = num_key_value_heads
        self.head_dim = hidden_size // num_attention_heads
        self.num_key_value_groups = num_attention_heads // num_key_value_heads
        # compute_dtype: e.g. jnp.bfloat16 on v6e/v7x to feed the MXU at native width
        # (f32 accumulation and f32 softmax math are kept inside the kernels).
        self.compute_dtype = compute_dtype
        self.repeat_present_kv = repeat_present_kv

        kq, kk, kv, ko = jax.random.split(key, 4)
        kv_dim = self.num_key_value_heads * self.head_dim
        s = 1.0 / math.sqrt(hidden_size)
        # nn.Linear weight layout: (out_features, in_features), bias=False
        self.w_q = jax.random.uniform(kq, (hidden_size, hidden_size), dtype, -s, s)
        self.w_k = jax.random.uniform(kk, (kv_dim, hidden_size), dtype, -s, s)
        self.w_v = jax.random.uniform(kv, (kv_dim, hidden_size), dtype, -s, s)
        self.w_o = jax.random.uniform(ko, (hidden_size, hidden_size), dtype, -s, s)

        # Pre-transposed (in, out) kernel weights — computed once, no per-call w.T
        # transpose over HBM.  Softmax scale is folded into the query projection.
        wdt = dtype if compute_dtype is None else compute_dtype
        scale = 1.0 / math.sqrt(self.head_dim)
        self.wq_t = (self.w_q * scale).T.astype(wdt)
        self.wk_t = self.w_k.T.astype(wdt)
        self.wv_t = self.w_v.T.astype(wdt)
        self.wo_t = self.w_o.T.astype(wdt)

    def _repeat_kv(self, x):
        G = self.num_key_value_groups
        if G == 1:
            return x
        B, NKV, S, D = x.shape
        return jnp.broadcast_to(x[:, :, None], (B, NKV, G, S, D)).reshape(
            B, NKV * G, S, D)

    def __call__(self, hidden_states, attention_mask=None, past_key_value=None):
        B, Sq, H = hidden_states.shape
        G = self.num_key_value_groups
        NKV = self.num_key_value_heads
        D = self.head_dim
        in_dtype = hidden_states.dtype
        cdt = self.compute_dtype

        if attention_mask is not None:
            # The torch reference only builds an additive mask when the mask contains
            # a zero, and F.scaled_dot_product_attention errors if that is combined
            # with is_causal=True — so only the trivial all-ones mask is usable.
            # Decide statically (no tracer->bool host sync).
            # TODO(synk): additive padding-mask path not implemented.
            try:
                mask_has_zero = bool((np.asarray(attention_mask) == 0).any())
            except Exception:
                raise NotImplementedError(
                    "attention_mask must be a concrete array; padding-mask path "
                    "is not implemented (causal-only attention)")
            if mask_has_zero:
                raise NotImplementedError(
                    "padding attention_mask not supported; causal-only path")

        x2d = hidden_states.reshape(B * Sq, H)
        if cdt is not None and x2d.dtype != cdt:
            x2d = x2d.astype(cdt)

        q = _linear(x2d, self.wq_t)            # (B*Sq, H), softmax scale folded in
        k = _linear(x2d, self.wk_t)            # (B*Sq, NKV*D)
        v = _linear(x2d, self.wv_t)

        # Group-interleaved query layout (B, NKV, Sq*G, D): row index = s*G + g for
        # attention head h = kvh*G + g.  One attention-grid step then batches the
        # whole GQA group into the M dimension of QK^T.
        # TODO(synk): these split/merge transposes are still full HBM passes; folding
        # them into the projection kernels' out_specs would need lane-sparse
        # (tn=head_dim) output tiles, which is worse than the transpose for D < 128.
        q = (q.reshape(B, Sq, NKV, G, D)
              .transpose(0, 2, 1, 3, 4)
              .reshape(B, NKV, Sq * G, D))
        k = k.reshape(B, Sq, NKV, D).transpose(0, 2, 1, 3)   # (B, NKV, Sq, D)
        v = v.reshape(B, Sq, NKV, D).transpose(0, 2, 1, 3)

        if past_key_value is not None:
            past_k, past_v = past_key_value
            if past_k.shape[1] != NKV:
                # Same limitation as the PyTorch reference: it caches the GQA-repeated
                # K/V, so a cache round trip only works when G == 1.
                raise ValueError(
                    "past_key_value head count must equal num_key_value_heads")
            k = jnp.concatenate((past_k.astype(k.dtype), k), axis=2)
            v = jnp.concatenate((past_v.astype(v.dtype), v), axis=2)

        Sk = k.shape[2]
        if Sk < Sq:
            raise ValueError("kv_seq_len must be >= q_seq_len for causal attention")

        if self.repeat_present_kv:
            # Matches the PyTorch module (GQA-repeated K/V).  Set
            # repeat_present_kv=False to skip the G x HBM write of the repeated cache.
            present_key_value = (self._repeat_kv(k), self._repeat_kv(v))
        else:
            present_key_value = (k, v)

        attn = _flash_sdpa_gqa(q, k, v, groups=G)            # (B, NKV, Sq*G, D)

        # Merge heads back to (B, Sq, H) with head order h = kvh*G + g.
        attn2d = (attn.reshape(B, NKV, Sq, G, D)
                      .transpose(0, 2, 1, 3, 4)
                      .reshape(B * Sq, H))
        out = _linear(attn2d, self.wo_t).reshape(B, Sq, H)
        if cdt is not None and out.dtype != in_dtype:
            out = out.astype(in_dtype)
        return out, present_key_value


# --------------------------------------------------------------------------
# Pure-JAX reference for sanity checking
# --------------------------------------------------------------------------

def _reference(mod, x):
    B, S, H = x.shape
    D = mod.head_dim
    q = x @ mod.w_q.T
    k = x @ mod.w_k.T
    v = x @ mod.w_v.T
    q = q.reshape(B, S, mod.num_attention_heads, D).transpose(0, 2, 1, 3)
    k = k.reshape(B, S, mod.num_key_value_heads, D).transpose(0, 2, 1, 3)
    v = v.reshape(B, S, mod.num_key_value_heads, D).transpose(0, 2, 1, 3)
    k = jnp.repeat(k, mod.num_key_value_groups, axis=1)
    v = jnp.repeat(v, mod.num_key_value_groups, axis=1)
    scale = 1.0 / math.sqrt(D)
    s = jnp.einsum('bhqd,bhkd->bhqk', q, k) * scale
    mask = jnp.tril(jnp.ones((S, S), dtype=bool))
    s = jnp.where(mask, s, -jnp.inf)
    p = jax.nn.softmax(s, axis=-1)
    o = jnp.einsum('bhqk,bhkd->bhqd', p, v)
    o = o.transpose(0, 2, 1, 3).reshape(B, S, H)
    return o @ mod.w_o.T


if __name__ == "__main__":
    key = jax.random.PRNGKey(0)
    k_param, k_input, k_param2, k_input2, k_param3, k_input3 = jax.random.split(key, 6)

    # ---- small smoke test (B=2, S=8, H=32, 4 heads / 2 kv heads: GQA groups=2) ----
    B, S, H = 2, 8, 32
    num_heads, num_kv_heads = 4, 2
    mod = StandardAttentionPallas(H, num_heads, num_kv_heads, key=k_param)
    x = jax.random.normal(k_input, (B, S, H), dtype=jnp.float32)

    out, (pres_k, pres_v) = mod(x)
    out = jax.block_until_ready(out)
    pres_k = jax.block_until_ready(pres_k)
    pres_v = jax.block_until_ready(pres_v)

    ref = _reference(mod, x)
    assert out.shape == (B, S, H)
    assert pres_k.shape == (B, num_heads, S, H // num_heads)
    assert pres_v.shape == (B, num_heads, S, H // num_heads)
    assert jnp.allclose(out, ref, atol=2e-4, rtol=2e-4), "small-case mismatch vs reference"

    # ---- larger check exercising multi-tile grid + causal DMA/compute skipping ----
    B2, S2, H2 = 1, 1024, 256
    num_heads2, num_kv_heads2 = 8, 4
    mod2 = StandardAttentionPallas(H2, num_heads2, num_kv_heads2, key=k_param2)
    x2 = jax.random.normal(k_input2, (B2, S2, H2), dtype=jnp.float32)
    out2, _ = mod2(x2)
    out2 = jax.block_until_ready(out2)
    ref2 = _reference(mod2, x2)
    assert jnp.allclose(out2, ref2, atol=2e-3, rtol=2e-3), "large-case mismatch vs reference"

    # ---- KV-cache decode step (groups=1 so the cache round-trips, as in torch) ----
    B3, S3, H3 = 1, 9, 32
    mod3 = StandardAttentionPallas(H3, 4, 4, key=k_param3)
    x_full = jax.random.normal(k_input3, (B3, S3, H3), dtype=jnp.float32)
    _, past = mod3(x_full[:, : S3 - 1])                       # prefill 8 tokens
    out_step, (pk3, pv3) = mod3(x_full[:, S3 - 1:], past_key_value=past)
    out_step = jax.block_until_ready(out_step)
    ref3 = _reference(mod3, x_full)[:, S3 - 1:]
    assert pk3.shape == (B3, 4, S3, H3 // 4)
    assert jnp.allclose(out_step, ref3, atol=2e-4, rtol=2e-4), "decode-step mismatch vs reference"

    print("KERNEL_OK")
</pallas_src>

<mosaic_0001>
module attributes {stable_mosaic.version = 11 : i64} {
  func.func @_matmul_kernel(%arg0: i32, %arg1: i32, %arg2: i32, %arg3: memref<16x32xf32, #tpu.memory_space<vmem>>, %arg4: memref<32x32xf32, #tpu.memory_space<vmem>>, %arg5: memref<16x32xf32, #tpu.memory_space<vmem>>, %arg6: memref<16x32xf32, #tpu.memory_space<vmem>>) attributes {dimension_semantics = [#tpu.dimension_semantics<parallel>, #tpu.dimension_semantics<parallel>, #tpu.dimension_semantics<arbitrary>], iteration_bounds = array<i64: 1, 1, 1>, scalar_prefetch = 0 : i64, scratch_operands = 1 : i64, tpu.core_type = #tpu.core_type<tc>, window_params = [{transform_indices = @transform_0, window_bounds = array<i64: 16, 32>}, {transform_indices = @transform_1, window_bounds = array<i64: 32, 32>}, {transform_indices = @transform_2, window_bounds = array<i64: 16, 32>}]} {
    %c0_i32 = arith.constant 0 : i32
    %0 = arith.cmpi eq, %arg2, %c0_i32 : i32
    %1 = arith.extui %0 : i1 to i32
    %c0_i32_0 = arith.constant 0 : i32
    %2 = arith.cmpi ne, %1, %c0_i32_0 : i32
    scf.if %2 {
      %cst_10 = arith.constant 0.000000e+00 : f32
      %12 = vector.broadcast %cst_10 : f32 to vector<16x32xf32>
      %c0_11 = arith.constant 0 : index
      %c0_12 = arith.constant 0 : index
      %13 = vector.load %arg6[%c0_11, %c0_12] : memref<16x32xf32, #tpu.memory_space<vmem>>, vector<16x32xf32>
      tpu.vector_store %arg6[%c0_11, %c0_12], %12 {strides = array<i32>} : memref<16x32xf32, #tpu.memory_space<vmem>>, vector<16x32xf32>,
    } else {
    }
    %c0 = arith.constant 0 : index
    %c0_1 = arith.constant 0 : index
    %3 = vector.load %arg6[%c0, %c0_1] : memref<16x32xf32, #tpu.memory_space<vmem>>, vector<16x32xf32>
    %c0_2 = arith.constant 0 : index
    %c0_3 = arith.constant 0 : index
    %4 = vector.load %arg3[%c0_2, %c0_3] : memref<16x32xf32, #tpu.memory_space<vmem>>, vector<16x32xf32>
    %c0_4 = arith.constant 0 : index
    %c0_5 = arith.constant 0 : index
    %5 = vector.load %arg4[%c0_4, %c0_5] : memref<32x32xf32, #tpu.memory_space<vmem>>, vector<32x32xf32>
    %cst = arith.constant dense<0.000000e+00> : vector<16x32xf32>
    %6 = tpu.matmul %4, %5, %cst {dimension_numbers = #tpu.dot_dimension_numbers<[1], [0], [0], [1], [0, 0, 1, 1], [], []>} : vector<16x32xf32>, vector<32x32xf32>, vector<16x32xf32> -> vector<16x32xf32>
    %7 = arith.addf %3, %6 : vector<16x32xf32>
    %c0_6 = arith.constant 0 : index
    %c0_7 = arith.constant 0 : index
    %8 = vector.load %arg6[%c0_6, %c0_7] : memref<16x32xf32, #tpu.memory_space<vmem>>, vector<16x32xf32>
    tpu.vector_store %arg6[%c0_6, %c0_7], %7 {strides = array<i32>} : memref<16x32xf32, #tpu.memory_space<vmem>>, vector<16x32xf32>,
    %c0_i32_8 = arith.constant 0 : i32
    %9 = arith.cmpi eq, %arg2, %c0_i32_8 : i32
    %10 = arith.extui %9 : i1 to i32
    %c0_i32_9 = arith.constant 0 : i32
    %11 = arith.cmpi ne, %10, %c0_i32_9 : i32
    scf.if %11 {
      %c0_10 = arith.constant 0 : index
      %c0_11 = arith.constant 0 : index
      %12 = vector.load %arg6[%c0_10, %c0_11] : memref<16x32xf32, #tpu.memory_space<vmem>>, vector<16x32xf32>
      %c0_12 = arith.constant 0 : index
      %c0_13 = arith.constant 0 : index
      %13 = vector.load %arg5[%c0_12, %c0_13] : memref<16x32xf32, #tpu.memory_space<vmem>>, vector<16x32xf32>
      tpu.vector_store %arg5[%c0_12, %c0_13], %12 {strides = array<i32>} : memref<16x32xf32, #tpu.memory_space<vmem>>, vector<16x32xf32>,
    } else {
    }
    return
  }
  func.func @transform_0(%arg0: i32, %arg1: i32, %arg2: i32) -> (i32, i32) {
    %c0_i32 = arith.constant 0 : i32
    return %arg0, %arg2 : i32, i32
  }
  func.func @transform_1(%arg0: i32, %arg1: i32, %arg2: i32) -> (i32, i32) {
    %c0_i32 = arith.constant 0 : i32
    return %arg2, %arg1 : i32, i32
  }
  func.func @transform_2(%arg0: i32, %arg1: i32, %arg2: i32) -> (i32, i32) {
    %c0_i32 = arith.constant 0 : i32
    return %arg0, %arg1 : i32, i32
  }
}

</mosaic_0001>

<llo_original>
// kernel: tpu_custom_call.1
$region0: #{tpu_custom_call.1}
  #allocation0 [shape = 'u32[]', space=smem, size = 0x4, offset = 0x4, fixed_abs, tag = 'smem constant byte address 0x4 - core index']
  #allocation1 [shape = 'u32[144,128]{1,0:T(1,128)}', space=vmem, size = 0x12000, scoped, tag = 'internal scratch']
  #allocation2 [shape = 'f32[16,32]{1,0:T(8,128)}', space=vmem, size = 0x2000, scoped, tag = 'scratch operand']
  %s0 = inlined_call_operand.hbm [shape: f32[16,32], index: 0, kind: input, shape index: {}]
  %s1 = inlined_call_operand.hbm [shape: f32[32,32], index: 1, kind: input, shape index: {}]
  %s2 = inlined_call_operand.hbm [shape: f32[16,32], index: 2, kind: output, shape index: {}]
  %s3 = sld [smem:[#allocation0]]
  $region34: #{tpu_custom_call.1} parent=0
    _
  %s5 = ssub.s32 1, %s3
  %s6 = scalar_select 0, %s5, %s3
  $region1: #{tpu_custom_call.1} parent=0
    #allocation3 [shape = 'u8[8192]{0}', space=vmem, size = 0x2000, scoped, tag = 'input window, operand 0, single buffered']
    #allocation4 [shape = 's32[1]{0}', space=sflag, size = 0x4, scoped, tag = 'scoped memory for tpu_custom_call.1']
    #allocation5 [shape = 's32[1]{0}', space=sflag, size = 0x4, scoped, tag = 'scoped memory for tpu_custom_call.1']
    #allocation6 [shape = 'u8[16384]{0}', space=vmem, size = 0x4000, scoped, tag = 'input window, operand 1, single buffered']
    #allocation7 [shape = 's32[1]{0}', space=sflag, size = 0x4, scoped, tag = 'scoped memory for tpu_custom_call.1']
    #allocation8 [shape = 'u8[8192]{0}', space=vmem, size = 0x2000, scoped, tag = 'output window, operand 0, single buffered']
    %7 = vsyncpa [#allocation4], 0
    %8 = vsyncpa [#allocation7], 0
    %9 = vsyncpa [#allocation5], 0
    // Predicated region
    $region2: #{tpu_custom_call.1} parent=1 // pred_check
      _
    $region3: #{tpu_custom_call.1} parent=1 // pred_check_branch
      %11 = sbr.rel (0) target = $region5
    $region4: #{tpu_custom_call.1} parent=1 // pred_region
      %s13 = ssub.s32 256, 256
      %14 = vsyncadd [#allocation4], %s13
      %s15 = sshll.u32 [#allocation3], 4
      %s16 = int_to_ptr.vmem [resolvable:$true] %s15
      %21 = dma.hbm_to_vmem [thread:$0]  %s0, 256, %s16, [#allocation4], 128, 128, 8
    $region5: #{tpu_custom_call.1} parent=1 // pred_fallthru
      _
    // Predicated region
    $region6: #{tpu_custom_call.1} parent=1 // pred_check
      _
    $region7: #{tpu_custom_call.1} parent=1 // pred_check_branch
      %23 = sbr.rel (0) target = $region9
    $region8: #{tpu_custom_call.1} parent=1 // pred_region
      %s25 = ssub.s32 512, 512
      %26 = vsyncadd [#allocation7], %s25
      %s27 = sshll.u32 [#allocation6], 4
      %s28 = int_to_ptr.vmem [resolvable:$true] %s27
      %33 = dma.hbm_to_vmem [thread:$0]  %s1, 512, %s28, [#allocation7], 128, 128, 8
    $region9: #{tpu_custom_call.1} parent=1 // pred_fallthru
      _
    // Predicated region
    $region10: #{tpu_custom_call.1} parent=1 // pred_check
      _
    $region11: #{tpu_custom_call.1} parent=1 // pred_check_branch
      %35 = sbr.rel (0) target = $region13
    $region12: #{tpu_custom_call.1} parent=1 // pred_region
      %36 = dma.done [#allocation4], 256
    $region13: #{tpu_custom_call.1} parent=1 // pred_fallthru
      _
    // Predicated region
    $region14: #{tpu_custom_call.1} parent=1 // pred_check
      _
    $region15: #{tpu_custom_call.1} parent=1 // pred_check_branch
      %38 = sbr.rel (0) target = $region17
    $region16: #{tpu_custom_call.1} parent=1 // pred_region
      %39 = dma.done [#allocation7], 512
    $region17: #{tpu_custom_call.1} parent=1 // pred_fallthru
      _
    %p40 = scmp.eq.s32.totalorder 0, 0
    // Predicated region
    $region18: #{tpu_custom_call.1} parent=1 // pred_check
      %p41 = pneg %p40
    $region19: #{tpu_custom_call.1} parent=1 // pred_check_branch
      %43 = sbr.rel (%p41) target = $region21
    $region20: #{tpu_custom_call.1} parent=1 // pred_region
      %vm44 = vcmask 261120
      %45 = vst.msk [vmem:[#allocation2] sm:$0xff] %vm44, 0.0
      %46 = vst.msk [vmem:[#allocation2 + $0x8] sm:$0xff] %vm44, 0.0
    $region21: #{tpu_custom_call.1} parent=1 // pred_fallthru
      _
    %v47 = vld [vmem:[#allocation2] sm:$0xff]
    %v48 = vld [vmem:[#allocation2 + $0x8] sm:$0xff]
    %v49 = vld [vmem:[#allocation3] sm:$0xff]
    %v50 = vld [vmem:[#allocation3 + $0x8] sm:$0xff]
    %v51 = vld [vmem:[#allocation6] sm:$0xff]
    %v52 = vld [vmem:[#allocation6 + $0x8] sm:$0xff]
    %v53 = vld [vmem:[#allocation6 + $0x10] sm:$0xff]
    %v54 = vld [vmem:[#allocation6 + $0x18] sm:$0xff]
    %vm55 = vcmask 261120
    %v57 = vsel %vm55, %v49, 0
    %v60 = vsel %vm55, %v50, 0
    %62 = vmatprep.subr.mxu0 0.0
    %63 = vmatpush1.msra.mxu0 %v51
    %64 = vmatprep.subr.mxu0 0.0
    %65 = vmatpush1.msra.mxu0 %v52
    %66 = vmatprep.subr.mxu0 0.0
    %67 = vmatpush1.msra.mxu0 %v53
    %68 = vmatprep.subr.mxu0 0.0
    %69 = vmatpush1.msra.mxu0 %v54
    %70 = vmatprep.subr.mxu0 0.0
    %71 = vmatpush1.msra.mxu0 0.0
    %72 = vmatprep.subr.mxu0 0.0
    %73 = vmatpush1.msra.mxu0 0.0
    %74 = vmatprep.subr.mxu0 0.0
    %75 = vmatpush1.msra.mxu0 0.0
    %76 = vmatprep.subr.mxu0 0.0
    %77 = vmatpush1.msra.mxu0 0.0
    %78 = vmatprep.subr.mxu0 0.0
    %79 = vmatpush1.msra.mxu0 0.0
    %80 = vmatprep.subr.mxu0 0.0
    %81 = vmatpush1.msra.mxu0 0.0
    %82 = vmatprep.subr.mxu0 0.0
    %83 = vmatpush1.msra.mxu0 0.0
    %84 = vmatprep.subr.mxu0 0.0
    %85 = vmatpush1.msra.mxu0 0.0
    %86 = vmatprep.subr.mxu0 0.0
    %87 = vmatpush1.msra.mxu0 0.0
    %88 = vmatprep.subr.mxu0 0.0
    %89 = vmatpush1.msra.mxu0 0.0
    %90 = vmatprep.subr.mxu0 0.0
    %91 = vmatpush1.msra.mxu0 0.0
    %92 = vmatprep.subr.mxu0 0.0
    %93 = vmatpush1.msra.mxu0 0.0
    %94 = vmatprep.subr.mxu0 0.0
    %95 = vmatpush1.msra.mxu0 0.0
    %96 = vmatprep.subr.mxu0 0.0
    %97 = vmatpush1.msra.mxu0 0.0
    %98 = vmatprep.subr.mxu0 0.0
    %99 = vmatpush1.msra.mxu0 0.0
    %100 = vmatprep.subr.mxu0 0.0
    %101 = vmatpush1.msra.mxu0 0.0
    %102 = vmatprep.subr.mxu0 0.0
    %103 = vmatpush1.msra.mxu0 0.0
    %104 = vmatprep.subr.mxu0 0.0
    %105 = vmatpush1.msra.mxu0 0.0
    %106 = vmatprep.subr.mxu0 0.0
    %107 = vmatpush1.msra.mxu0 0.0
    %108 = vmatprep.subr.mxu0 0.0
    %109 = vmatpush1.msra.mxu0 0.0
    %110 = vmatprep.subr.mxu0 0.0
    %111 = vmatpush1.msra.mxu0 0.0
    %112 = vmatprep.subr.mxu0 0.0
    %113 = vmatpush1.msra.mxu0 0.0
    %114 = vmatprep.subr.mxu0 0.0
    %115 = vmatpush1.msra.mxu0 0.0
    %116 = vmatprep.subr.mxu0 0.0
    %117 = vmatpush1.msra.mxu0 0.0
    %118 = vmatprep.subr.mxu0 0.0
    %119 = vmatpush1.msra.mxu0 0.0
    %120 = vmatprep.subr.mxu0 0.0
    %121 = vmatpush1.msra.mxu0 0.0
    %122 = vmatprep.subr.mxu0 0.0
    %123 = vmatpush1.msra.mxu0 0.0
    %124 = vmatprep.subr.mxu0 0.0
    %125 = vmatpush1.msra.mxu0 0.0
    %126 = vmatprep.mubr.f32.mxu0 0.0
    %127 = vmatmul.mubr.f32.gmra.mrb[0].mxu0 %v57
    %v128 = vpop.f32.mrb[0].mxu0
    %v129 = vadd.f32 0.0, %v128
    %v130 = vpop.f32.mrb[0].mxu0
    %131 = vmatprep.mubr.f32.mxu0 0.0
    %132 = vmatmul.mubr.f32.gmra.mrb[0].mxu0 %v60
    %v133 = vpop.f32.mrb[0].mxu0
    %v134 = vadd.f32 0.0, %v133
    %v135 = vpop.f32.mrb[0].mxu0
    %136 = vdwg.mxu0
    %v137 = vadd.f32 %v47, %v129
    %v138 = vadd.f32 %v48, %v134
    %139 = vst.msk [vmem:[#allocation2] sm:$0xff] %vm55, %v137
    %140 = vst.msk [vmem:[#allocation2 + $0x8] sm:$0xff] %vm55, %v138
    // Predicated region
    $region22: #{tpu_custom_call.1} parent=1 // pred_check
      %p141 = pneg %p40
    $region23: #{tpu_custom_call.1} parent=1 // pred_check_branch
      %143 = sbr.rel (%p141) target = $region25
    $region24: #{tpu_custom_call.1} parent=1 // pred_region
      %v144 = vld [vmem:[#allocation2] sm:$0xff]
      %v145 = vld [vmem:[#allocation2 + $0x8] sm:$0xff]
      %146 = vst.msk [vmem:[#allocation8] sm:$0xff] %vm55, %v144
      %147 = vst.msk [vmem:[#allocation8 + $0x8] sm:$0xff] %vm55, %v145
    $region25: #{tpu_custom_call.1} parent=1 // pred_fallthru
      _
    // Predicated region
    $region26: #{tpu_custom_call.1} parent=1 // pred_check
      _
    $region27: #{tpu_custom_call.1} parent=1 // pred_check_branch
      %149 = sbr.rel (0) target = $region29
    $region28: #{tpu_custom_call.1} parent=1 // pred_region
      %s151 = ssub.s32 256, 256
      %152 = vsyncadd [#allocation5], %s151
      %s153 = sshll.u32 [#allocation8], 4
      %s154 = int_to_ptr.vmem [resolvable:$true] %s153
      %159 = dma.vmem_to_hbm [thread:$0]  %s154, 256, %s2, [#allocation5], 128, 128, 8
    $region29: #{tpu_custom_call.1} parent=1 // pred_fallthru
      _
    // Predicated region
    $region30: #{tpu_custom_call.1} parent=1 // pred_check
      _
    $region31: #{tpu_custom_call.1} parent=1 // pred_check_branch
      %161 = sbr.rel (0) target = $region33
    $region32: #{tpu_custom_call.1} parent=1 // pred_region
      %162 = dma.done [#allocation5], 256
    $region33: #{tpu_custom_call.1} parent=1 // pred_fallthru
      _
    %163 = vsyncpa [#allocation4], 1
    %164 = vsyncpa [#allocation7], 1
    %165 = vsyncpa [#allocation5], 1

</llo_original>
